<compile_context>
chip_gen: v5e
topology: v5e:2x2
jax: 0.10.0
libtpu: 0.0.40
codegen_flags: <defaults>
</compile_context>

<pallas_src>
import functools

import jax
import jax.numpy as jnp
from jax.experimental import pallas as pl
from jax.experimental.pallas import tpu as pltpu

EPS = 1e-5  # nn.BatchNorm2d default eps


def _round_up(x, m):
    return (x + m - 1) // m * m


# ---------------------------------------------------------------------------
# Kernels
# ---------------------------------------------------------------------------

def conv_stats_kernel(x_ref, w_ref, y_ref, stats_ref):
    """One M-tile of the conv-as-matmul plus its partial BatchNorm statistics.

    x_ref:     (TILE_M, K_pad)  im2col patches tile
    w_ref:     (K_pad, C_pad)   weight matrix (resident across the grid)
    y_ref:     (TILE_M, C_pad)  conv output tile (pre-BN)
    stats_ref: (8, C_pad)       row 0 = per-channel sum, row 1 = sum of squares
    """
    y = jnp.dot(x_ref[...], w_ref[...], preferred_element_type=jnp.float32)
    y_ref[...] = y
    s = jnp.sum(y, axis=0, keepdims=True)
    sq = jnp.sum(y * y, axis=0, keepdims=True)
    pad = jnp.zeros((6, y.shape[1]), jnp.float32)
    stats_ref[...] = jnp.concatenate([s, sq, pad], axis=0)


def bn_relu_kernel(y_ref, ss_ref, o_ref):
    """Apply the folded BN affine (scale/shift) and ReLU to one M-tile."""
    scale = ss_ref[0:1, :]
    shift = ss_ref[1:2, :]
    o_ref[...] = jnp.maximum(y_ref[...] * scale + shift, 0.0)


# ---------------------------------------------------------------------------
# Per-stage wrapper (conv 3x3 s1 p1 + BN(train) + ReLU)
# ---------------------------------------------------------------------------

def _im2col(x_nhwc, k=3, pad=1):
    # TODO(synk): build the 3x3 patches in-kernel from halo row tiles to remove
    # this 9x-inflated activation copy in HBM (the remaining big traffic win).
    N, H, W, C = x_nhwc.shape
    xp = jnp.pad(x_nhwc, ((0, 0), (pad, pad), (pad, pad), (0, 0)))
    cols = [xp[:, ky:ky + H, kx:kx + W, :] for ky in range(k) for kx in range(k)]
    patches = jnp.stack(cols, axis=-1)              # (N, H, W, C, k*k)
    return patches.reshape(N * H * W, C * k * k)    # (c, ky, kx) minor order = OIHW flatten


def conv_bn_relu(x_nhwc, w_oihw, gamma, beta, *, tile_m=512,
                 matmul_dtype=jnp.float32):
    # matmul_dtype=jnp.bfloat16 can be used on v6e/v7x for ~2x MXU throughput
    # (accumulation stays f32 via preferred_element_type).
    N, H, W, Cin = x_nhwc.shape
    Cout = w_oihw.shape[0]
    K = Cin * 9
    M = N * H * W

    tile_m = min(tile_m, _round_up(M, 8))
    K_pad = _round_up(K, 128)
    C_pad = _round_up(Cout, 128)
    M_pad = _round_up(M, tile_m)
    n_tiles = M_pad // tile_m
    in_bytes = jnp.dtype(matmul_dtype).itemsize

    patches = _im2col(x_nhwc)
    patches = jnp.pad(patches, ((0, M_pad - M), (0, K_pad - K))).astype(matmul_dtype)
    # Conv bias intentionally NOT used: it cancels exactly under train-mode BN.
    wmat = jnp.pad(w_oihw.reshape(Cout, K).T,
                   ((0, K_pad - K), (0, C_pad - Cout))).astype(matmul_dtype)

    # ---- Phase 1: conv matmul + per-tile partial BN sum / sum-of-squares ----
    y, part_stats = pl.pallas_call(
        conv_stats_kernel,
        grid=(n_tiles,),
        in_specs=[
            pl.BlockSpec((tile_m, K_pad), lambda i: (i, 0)),
            pl.BlockSpec((K_pad, C_pad), lambda i: (0, 0)),   # resident weights
        ],
        out_specs=(
            pl.BlockSpec((tile_m, C_pad), lambda i: (i, 0)),
            pl.BlockSpec((8, C_pad), lambda i: (i, 0)),
        ),
        out_shape=(
            jax.ShapeDtypeStruct((M_pad, C_pad), jnp.float32),
            jax.ShapeDtypeStruct((n_tiles * 8, C_pad), jnp.float32),
        ),
        compiler_params=pltpu.CompilerParams(dimension_semantics=("parallel",)),
        cost_estimate=pl.CostEstimate(
            flops=2 * M_pad * K_pad * C_pad,
            transcendentals=0,
            bytes_accessed=(M_pad * K_pad + K_pad * C_pad) * in_bytes
                           + (M_pad * C_pad + n_tiles * 8 * C_pad) * 4),
    )(patches, wmat)

    # ---- Global batch statistics + folded affine (tiny per-channel math) ----
    stats = part_stats.reshape(n_tiles, 8, C_pad)
    ch_sum = jnp.sum(stats[:, 0, :], axis=0)
    ch_sumsq = jnp.sum(stats[:, 1, :], axis=0)
    mean = ch_sum / M
    var = jnp.maximum(ch_sumsq / M - mean * mean, 0.0)   # biased (train-mode) variance
    gamma_p = jnp.pad(gamma.astype(jnp.float32), (0, C_pad - Cout))
    beta_p = jnp.pad(beta.astype(jnp.float32), (0, C_pad - Cout))
    scale = gamma_p * jax.lax.rsqrt(var + EPS)
    shift = beta_p - mean * scale
    ss = jnp.zeros((8, C_pad), jnp.float32).at[0].set(scale).at[1].set(shift)

    # ---- Phase 2: normalize (scale/shift) + ReLU ----
    out = pl.pallas_call(
        bn_relu_kernel,
        grid=(n_tiles,),
        in_specs=[
            pl.BlockSpec((tile_m, C_pad), lambda i: (i, 0)),
            pl.BlockSpec((8, C_pad), lambda i: (0, 0)),       # resident scale/shift
        ],
        out_specs=pl.BlockSpec((tile_m, C_pad), lambda i: (i, 0)),
        out_shape=jax.ShapeDtypeStruct((M_pad, C_pad), jnp.float32),
        compiler_params=pltpu.CompilerParams(dimension_semantics=("parallel",)),
        cost_estimate=pl.CostEstimate(
            flops=2 * M_pad * C_pad,
            transcendentals=0,
            bytes_accessed=2 * M_pad * C_pad * 4 + 8 * C_pad * 4),
    )(y, ss)

    return out[:M, :Cout].reshape(N, H, W, Cout)


def double_conv2d_forward(x_nchw, params, *, tile_m=512):
    # NCHW -> NHWC once at entry; the stage-1 -> stage-2 intermediate stays NHWC.
    x = jnp.transpose(x_nchw, (0, 2, 3, 1))
    x = conv_bn_relu(x, params["w1"], params["g1"], params["be1"], tile_m=tile_m)
    x = conv_bn_relu(x, params["w2"], params["g2"], params["be2"], tile_m=tile_m)
    return jnp.transpose(x, (0, 3, 1, 2))


# ---------------------------------------------------------------------------
# Pure-JAX reference (with conv bias, to confirm it cancels under train-mode BN)
# ---------------------------------------------------------------------------

def _reference_forward(x_nchw, params):
    def conv(x, w, b):
        y = jax.lax.conv_general_dilated(
            x, w, window_strides=(1, 1), padding=((1, 1), (1, 1)),
            dimension_numbers=("NCHW", "OIHW", "NCHW"))
        return y + b[None, :, None, None]

    def bn_relu(y, g, be):
        mean = y.mean(axis=(0, 2, 3), keepdims=True)
        var = ((y - mean) ** 2).mean(axis=(0, 2, 3), keepdims=True)
        y = g[None, :, None, None] * (y - mean) * jax.lax.rsqrt(var + EPS) \
            + be[None, :, None, None]
        return jnp.maximum(y, 0.0)

    y = bn_relu(conv(x_nchw, params["w1"], params["b1"]), params["g1"], params["be1"])
    y = bn_relu(conv(y, params["w2"], params["b2"]), params["g2"], params["be2"])
    return y


if __name__ == "__main__":
    key = jax.random.PRNGKey(0)
    N, Cin, Cout, H, W = 2, 4, 8, 16, 16

    keys = jax.random.split(key, 9)
    x = jax.random.normal(keys[0], (N, Cin, H, W), dtype=jnp.float32)

    params = {
        "w1": 0.1 * jax.random.normal(keys[1], (Cout, Cin, 3, 3), jnp.float32),
        "b1": 0.1 * jax.random.normal(keys[2], (Cout,), jnp.float32),
        "g1": 1.0 + 0.1 * jax.random.normal(keys[3], (Cout,), jnp.float32),
        "be1": 0.1 * jax.random.normal(keys[4], (Cout,), jnp.float32),
        "w2": 0.1 * jax.random.normal(keys[5], (Cout, Cout, 3, 3), jnp.float32),
        "b2": 0.1 * jax.random.normal(keys[6], (Cout,), jnp.float32),
        "g2": 1.0 + 0.1 * jax.random.normal(keys[7], (Cout,), jnp.float32),
        "be2": 0.1 * jax.random.normal(keys[8], (Cout,), jnp.float32),
    }

    # tile_m=128 at this toy size -> a 4-step grid per stage (exercises pipelining).
    fwd = jax.jit(functools.partial(double_conv2d_forward, tile_m=128))
    out = jax.block_until_ready(fwd(x, params))

    ref = jax.block_until_ready(_reference_forward(x, params))
    assert out.shape == (N, Cout, H, W)
    assert jnp.allclose(out, ref, atol=1e-2, rtol=1e-2), "Pallas output mismatch vs reference"

    print("KERNEL_OK")
</pallas_src>

<mosaic_0001>
module attributes {stable_mosaic.version = 11 : i64} {
  func.func @conv_stats_kernel(%arg0: i32, %arg1: memref<128x128xf32, #tpu.memory_space<vmem>>, %arg2: memref<128x128xf32, #tpu.memory_space<vmem>>, %arg3: memref<128x128xf32, #tpu.memory_space<vmem>>, %arg4: memref<8x128xf32, #tpu.memory_space<vmem>>) attributes {dimension_semantics = [#tpu.dimension_semantics<parallel>], iteration_bounds = array<i64: 4>, scalar_prefetch = 0 : i64, scratch_operands = 0 : i64, tpu.core_type = #tpu.core_type<tc>, window_params = [{transform_indices = @transform_0, window_bounds = array<i64: 128, 128>}, {pipeline_mode = #tpu.pipeline_mode<synchronous>, transform_indices = @transform_1, window_bounds = array<i64: 128, 128>}, {transform_indices = @transform_2, window_bounds = array<i64: 128, 128>}, {transform_indices = @transform_3, window_bounds = array<i64: 8, 128>}]} {
    %c0 = arith.constant 0 : index
    %c0_0 = arith.constant 0 : index
    %0 = vector.load %arg1[%c0, %c0_0] : memref<128x128xf32, #tpu.memory_space<vmem>>, vector<128x128xf32>
    %c0_1 = arith.constant 0 : index
    %c0_2 = arith.constant 0 : index
    %1 = vector.load %arg2[%c0_1, %c0_2] : memref<128x128xf32, #tpu.memory_space<vmem>>, vector<128x128xf32>
    %cst = arith.constant dense<0.000000e+00> : vector<128x128xf32>
    %2 = tpu.matmul %0, %1, %cst {dimension_numbers = #tpu.dot_dimension_numbers<[1], [0], [0], [1], [0, 0, 1, 1], [], []>} : vector<128x128xf32>, vector<128x128xf32>, vector<128x128xf32> -> vector<128x128xf32>
    %c0_3 = arith.constant 0 : index
    %c0_4 = arith.constant 0 : index
    %3 = vector.load %arg3[%c0_3, %c0_4] : memref<128x128xf32, #tpu.memory_space<vmem>>, vector<128x128xf32>
    tpu.vector_store %arg3[%c0_3, %c0_4], %2 {strides = array<i32>} : memref<128x128xf32, #tpu.memory_space<vmem>>, vector<128x128xf32>,
    %cst_5 = arith.constant dense<0.000000e+00> : vector<128xf32>
    %4 = vector.multi_reduction <add>, %2, %cst_5 [0] : vector<128x128xf32> to vector<128xf32>
    %5 = vector.shape_cast %4 : vector<128xf32> to vector<1x128xf32>
    %6 = arith.mulf %2, %2 : vector<128x128xf32>
    %cst_6 = arith.constant dense<0.000000e+00> : vector<128xf32>
    %7 = vector.multi_reduction <add>, %6, %cst_6 [0] : vector<128x128xf32> to vector<128xf32>
    %8 = vector.shape_cast %7 : vector<128xf32> to vector<1x128xf32>
    %cst_7 = arith.constant 0.000000e+00 : f32
    %9 = vector.broadcast %cst_7 : f32 to vector<6x128xf32>
    %10 = tpu.concatenate %5, %8, %9 in 0 : vector<1x128xf32>, vector<1x128xf32>, vector<6x128xf32> -> vector<8x128xf32>
    %c0_8 = arith.constant 0 : index
    %c0_9 = arith.constant 0 : index
    %11 = vector.load %arg4[%c0_8, %c0_9] : memref<8x128xf32, #tpu.memory_space<vmem>>, vector<8x128xf32>
    tpu.vector_store %arg4[%c0_8, %c0_9], %10 {strides = array<i32>} : memref<8x128xf32, #tpu.memory_space<vmem>>, vector<8x128xf32>,
    return
  }
  func.func @transform_0(%arg0: i32) -> (i32, i32) {
    %c0_i32 = arith.constant 0 : i32
    %c0_i32_0 = arith.constant 0 : i32
    return %arg0, %c0_i32 : i32, i32
  }
  func.func @transform_1(%arg0: i32) -> (i32, i32) {
    %c0_i32 = arith.constant 0 : i32
    %c0_i32_0 = arith.constant 0 : i32
    %c0_i32_1 = arith.constant 0 : i32
    return %c0_i32, %c0_i32_0 : i32, i32
  }
  func.func @transform_2(%arg0: i32) -> (i32, i32) {
    %c0_i32 = arith.constant 0 : i32
    %c0_i32_0 = arith.constant 0 : i32
    return %arg0, %c0_i32 : i32, i32
  }
  func.func @transform_3(%arg0: i32) -> (i32, i32) {
    %c0_i32 = arith.constant 0 : i32
    %c0_i32_0 = arith.constant 0 : i32
    return %arg0, %c0_i32 : i32, i32
  }
}

module attributes {stable_mosaic.version = 11 : i64} {
  func.func @bn_relu_kernel(%arg0: i32, %arg1: memref<128x128xf32, #tpu.memory_space<vmem>>, %arg2: memref<8x128xf32, #tpu.memory_space<vmem>>, %arg3: memref<128x128xf32, #tpu.memory_space<vmem>>) attributes {dimension_semantics = [#tpu.dimension_semantics<parallel>], iteration_bounds = array<i64: 4>, scalar_prefetch = 0 : i64, scratch_operands = 0 : i64, tpu.core_type = #tpu.core_type<tc>, window_params = [{transform_indices = @transform_0, window_bounds = array<i64: 128, 128>}, {pipeline_mode = #tpu.pipeline_mode<synchronous>, transform_indices = @transform_1, window_bounds = array<i64: 8, 128>}, {transform_indices = @transform_2, window_bounds = array<i64: 128, 128>}]} {
    %c0 = arith.constant 0 : index
    %c0_0 = arith.constant 0 : index
    %0 = vector.load %arg2[%c0, %c0_0] : memref<8x128xf32, #tpu.memory_space<vmem>>, vector<1x128xf32>
    %c1 = arith.constant 1 : index
    %c0_1 = arith.constant 0 : index
    %1 = vector.load %arg2[%c1, %c0_1] : memref<8x128xf32, #tpu.memory_space<vmem>>, vector<1x128xf32>
    %c0_2 = arith.constant 0 : index
    %c0_3 = arith.constant 0 : index
    %2 = vector.load %arg1[%c0_2, %c0_3] : memref<128x128xf32, #tpu.memory_space<vmem>>, vector<128x128xf32>
    %3 = vector.broadcast %0 : vector<1x128xf32> to vector<128x128xf32>
    %4 = arith.mulf %2, %3 : vector<128x128xf32>
    %5 = vector.broadcast %1 : vector<1x128xf32> to vector<128x128xf32>
    %6 = arith.addf %4, %5 : vector<128x128xf32>
    %cst = arith.constant 0.000000e+00 : f32
    %7 = vector.broadcast %cst : f32 to vector<128x128xf32>
    %8 = arith.maximumf %6, %7 : vector<128x128xf32>
    %c0_4 = arith.constant 0 : index
    %c0_5 = arith.constant 0 : index
    %9 = vector.load %arg3[%c0_4, %c0_5] : memref<128x128xf32, #tpu.memory_space<vmem>>, vector<128x128xf32>
    tpu.vector_store %arg3[%c0_4, %c0_5], %8 {strides = array<i32>} : memref<128x128xf32, #tpu.memory_space<vmem>>, vector<128x128xf32>,
    return
  }
  func.func @transform_0(%arg0: i32) -> (i32, i32) {
    %c0_i32 = arith.constant 0 : i32
    %c0_i32_0 = arith.constant 0 : i32
    return %arg0, %c0_i32 : i32, i32
  }
  func.func @transform_1(%arg0: i32) -> (i32, i32) {
    %c0_i32 = arith.constant 0 : i32
    %c0_i32_0 = arith.constant 0 : i32
    %c0_i32_1 = arith.constant 0 : i32
    return %c0_i32, %c0_i32_0 : i32, i32
  }
  func.func @transform_2(%arg0: i32) -> (i32, i32) {
    %c0_i32 = arith.constant 0 : i32
    %c0_i32_0 = arith.constant 0 : i32
    return %arg0, %c0_i32 : i32, i32
  }
}

</mosaic_0001>

<llo_original>
// kernel: double_conv2d_forward.4
$region0: #{double_conv2d_forward.4}
  #allocation0 [shape = 'u32[]', space=smem, size = 0x4, offset = 0x4, fixed_abs, tag = 'smem constant byte address 0x4 - core index']
  #allocation1 [shape = 'u32[72,128]{1,0:T(1,128)}', space=vmem, size = 0x9000, scoped, tag = 'internal scratch']
  %s0 = inlined_call_operand.vmem [shape: f32[512,128], index: 0, kind: input, shape index: {}]
  %s1 = inlined_call_operand.vmem [shape: f32[128,128], index: 1, kind: input, shape index: {}]
  %s2 = inlined_call_operand.vmem [shape: f32[512,128], index: 2, kind: output, shape index: {0}]
  %s3 = inlined_call_operand.vmem [shape: f32[32,128], index: 3, kind: output, shape index: {1}]
  %4 = xla_tuple %s2, %s3
  %s5 = sld [smem:[#allocation0]]
  $region49: #{double_conv2d_forward.4} parent=0
    _
  %s7 = ssub.s32 1, %s5
  %s8 = scalar_select 0, %s7, %s5
  loop: start=0, step=1, limit=6
  $region2: #{double_conv2d_forward.4} parent=0 // loop_pre_header
    _
  $region3: #{double_conv2d_forward.4} parent=0 // loop_header
    %s10 = sphi 0, %s14
    %p11 = scmp.ge.s32.totalorder %s10, 6
    %s20 = sphi 0, %s22
    %s23 = sphi 0, %s20
    %s24 = sphi 0, %s23
    %s40 = sphi 0, %s24
    %s44 = sphi 0, %s44
    %s46 = sphi 0, %s44
    %s47 = sphi 0, %s46
    %s61 = sphi 0, %s47
    %s67 = sphi 0, %s69
    %s70 = sphi 0, %s67
    %s71 = sphi 0, %s70
    %s87 = sphi 0, %s71
    %s93 = sphi 0, %s95
    %s96 = sphi 0, %s93
    %s97 = sphi 0, %s96
    %s113 = sphi 0, %s97
  $region4: #{double_conv2d_forward.4} parent=0 // loop_header_branch
    %13 = sbr.rel (%p11) target = $region8
  $region5: #{double_conv2d_forward.4} parent=0 // loop_body
    %s15 = ssub.s32 %s10, 1
    %s16 = ssub.s32 %s10, 2
    %s17 = sadd.s32 %s10, 1
    %s18 = ssub.s32 %s10, %s17
    %p19 = scmp.eq.s32.totalorder %s18, 0
    %s21 = sadd.s32 %s20, 1
    %s22 = scalar_select %p19, %s20, %s21
    %p25 = pneg %p19
    %p26 = scmp.eq.s32.totalorder %s10, 3
    %p27 = por %p25, %p26
    %p28 = scmp.ne.s32.totalorder %s20, %s23
    %p29 = scmp.eq.s32.totalorder %s10, 0
    %p30 = por %p28, %p29
    %p31 = scmp.ne.s32.totalorder %s20, %s23
    %p32 = scmp.eq.s32.totalorder %s15, 3
    %p33 = por %p31, %p32
    %p34 = scmp.ne.s32.totalorder %s23, %s24
    %p35 = scmp.eq.s32.totalorder %s15, 0
    %p36 = por %p34, %p35
    %p37 = scmp.ne.s32.totalorder %s23, %s24
    %p38 = scmp.eq.s32.totalorder %s16, 3
    %p39 = por %p37, %p38
    %p41 = scmp.ne.s32.totalorder %s24, %s40
    %p42 = scmp.eq.s32.totalorder %s16, 0
    %p43 = por %p41, %p42
    %s45 = sadd.s32 %s44, 1
    %p48 = scmp.eq.s32.totalorder %s10, 3
    %p49 = scmp.ne.s32.totalorder %s44, %s46
    %p50 = scmp.eq.s32.totalorder %s10, 0
    %p51 = por %p49, %p50
    %p52 = scmp.ne.s32.totalorder %s44, %s46
    %p53 = scmp.eq.s32.totalorder %s15, 3
    %p54 = por %p52, %p53
    %p55 = scmp.ne.s32.totalorder %s46, %s47
    %p56 = scmp.eq.s32.totalorder %s15, 0
    %p57 = por %p55, %p56
    %p58 = scmp.ne.s32.totalorder %s46, %s47
    %p59 = scmp.eq.s32.totalorder %s16, 3
    %p60 = por %p58, %p59
    %p62 = scmp.ne.s32.totalorder %s47, %s61
    %p63 = scmp.eq.s32.totalorder %s16, 0
    %p64 = por %p62, %p63
    %s65 = ssub.s32 %s10, %s17
    %p66 = scmp.eq.s32.totalorder %s65, 0
    %s68 = sadd.s32 %s67, 1
    %s69 = scalar_select %p66, %s67, %s68
    %p72 = pneg %p66
    %p73 = scmp.eq.s32.totalorder %s10, 3
    %p74 = por %p72, %p73
    %p75 = scmp.ne.s32.totalorder %s67, %s70
    %p76 = scmp.eq.s32.totalorder %s10, 0
    %p77 = por %p75, %p76
    %p78 = scmp.ne.s32.totalorder %s67, %s70
    %p79 = scmp.eq.s32.totalorder %s15, 3
    %p80 = por %p78, %p79
    %p81 = scmp.ne.s32.totalorder %s70, %s71
    %p82 = scmp.eq.s32.totalorder %s15, 0
    %p83 = por %p81, %p82
    %p84 = scmp.ne.s32.totalorder %s70, %s71
    %p85 = scmp.eq.s32.totalorder %s16, 3
    %p86 = por %p84, %p85
    %p88 = scmp.ne.s32.totalorder %s71, %s87
    %p89 = scmp.eq.s32.totalorder %s16, 0
    %p90 = por %p88, %p89
    %s91 = ssub.s32 %s10, %s17
    %p92 = scmp.eq.s32.totalorder %s91, 0
    %s94 = sadd.s32 %s93, 1
    %s95 = scalar_select %p92, %s93, %s94
    %p98 = pneg %p92
    %p99 = scmp.eq.s32.totalorder %s10, 3
    %p100 = por %p98, %p99
    %p101 = scmp.ne.s32.totalorder %s93, %s96
    %p102 = scmp.eq.s32.totalorder %s10, 0
    %p103 = por %p101, %p102
    %p104 = scmp.ne.s32.totalorder %s93, %s96
    %p105 = scmp.eq.s32.totalorder %s15, 3
    %p106 = por %p104, %p105
    %p107 = scmp.ne.s32.totalorder %s96, %s97
    %p108 = scmp.eq.s32.totalorder %s15, 0
    %p109 = por %p107, %p108
    %p110 = scmp.ne.s32.totalorder %s96, %s97
    %p111 = scmp.eq.s32.totalorder %s16, 3
    %p112 = por %p110, %p111
    %p114 = scmp.ne.s32.totalorder %s97, %s113
    %p115 = scmp.eq.s32.totalorder %s16, 0
    %p116 = por %p114, %p115
    %p117 = scmp.le.s32.totalorder 1, %s10
    %p118 = scmp.lt.s32.totalorder %s10, 5
    %p119 = pnand %p117, %p118
    %p120 = pneg %p119
    // Predicated region
    $region9: #{double_conv2d_forward.4} parent=5 // pred_check
      _
    $region10: #{double_conv2d_forward.4} parent=5 // pred_check_branch
      %122 = sbr.rel (%p119) target = $region12
    $region11: #{double_conv2d_forward.4} parent=5 // pred_region
      %s123 = ssub.s32 %s10, 1
      // Predicated region
      $region13: #{double_conv2d_forward.4} parent=11 // pred_check
        %p124 = pneg %p57
      $region14: #{double_conv2d_forward.4} parent=11 // pred_check_branch
        %126 = sbr.rel (%p124) target = $region16
      $region15: #{double_conv2d_forward.4} parent=11 // pred_region
        _
      $region16: #{double_conv2d_forward.4} parent=11 // pred_fallthru
        _
    $region12: #{double_conv2d_forward.4} parent=5 // pred_fallthru
      _
    %p127 = scmp.lt.s32.totalorder %s10, 4
    // Predicated region
    $region17: #{double_conv2d_forward.4} parent=5 // pred_check
      %p128 = pneg %p127
    $region18: #{double_conv2d_forward.4} parent=5 // pred_check_branch
      %130 = sbr.rel (%p128) target = $region20
    $region19: #{double_conv2d_forward.4} parent=5 // pred_region
      // Predicated region
      $region21: #{double_conv2d_forward.4} parent=19 // pred_check
        %p131 = pneg %p30
      $region22: #{double_conv2d_forward.4} parent=19 // pred_check_branch
        %133 = sbr.rel (%p131) target = $region24
      $region23: #{double_conv2d_forward.4} parent=19 // pred_region
        %s134 = smul.u32 16, %s10
        %p135 = scmp.lt.s32.totalorder %s134, 63
        %s136 = scalar_select %p135, %s134, 63
        %s137 = smul.addr %s136, 8
        %s138 = scalar_lea.vmem %s0, %s137
        %s139 = smul.u32 16, %s10
      $region24: #{double_conv2d_forward.4} parent=19 // pred_fallthru
        _
    $region20: #{double_conv2d_forward.4} parent=5 // pred_fallthru
      _
    %p140 = scmp.le.s32.totalorder 1, %s10
    %p141 = scmp.lt.s32.totalorder %s10, 5
    %p142 = pnand %p140, %p141
    %p143 = pneg %p142
    // Predicated region
    $region25: #{double_conv2d_forward.4} parent=5 // pred_check
      _
    $region26: #{double_conv2d_forward.4} parent=5 // pred_check_branch
      %145 = sbr.rel (%p142) target = $region28
    $region27: #{double_conv2d_forward.4} parent=5 // pred_region
      %s146 = ssub.s32 %s10, 1
      %s147 = smul.u32 16, %s15
      %p148 = scmp.lt.s32.totalorder %s147, 63
      %s149 = scalar_select %p148, %s147, 63
      %s150 = smul.addr %s149, 8
      %s151 = scalar_lea.vmem %s0, %s150
      %p152 = pneg %p36
      %p153 = pneg %p33
      %p154 = pneg %p57
      %p155 = pneg %p54
      %p156 = pneg %p83
      %p157 = pneg %p80
      %s158 = smul.u32 16, %s15
      %p159 = scmp.lt.s32.totalorder %s158, 63
      %s160 = scalar_select %p159, %s158, 63
      %s161 = smul.addr %s160, 8
      %s162 = scalar_lea.vmem %s2, %s161
      %p163 = pneg %p109
      %p164 = pneg %p106
      %p165 = scmp.lt.s32.totalorder %s15, 3
      %s166 = scalar_select %p165, %s15, 3
      %s167 = smul.addr %s166, 8
      %s168 = scalar_lea.vmem %s3, %s167
      %s169 = smul.u32 16, %s15
      %p170 = scmp.lt.s32.totalorder %s169, 63
      %s171 = scalar_select %p170, %s169, 63
      %s172 = smul.addr %s171, 8
      %s173 = scalar_lea.vmem %s0, %s172
      %s174 = smul.u32 16, %s15
      %s175 = smul.u32 16, %s15
      %p176 = scmp.lt.s32.totalorder %s175, 63
      %s177 = scalar_select %p176, %s175, 63
      %s178 = smul.addr %s177, 8
      %s179 = scalar_lea.vmem %s2, %s178
      %s180 = smul.u32 16, %s15
      %p181 = scmp.lt.s32.totalorder %s15, 3
      %s182 = scalar_select %p181, %s15, 3
      %s183 = smul.addr %s182, 8
      %s184 = scalar_lea.vmem %s3, %s183
      %v185 = vld [vmem:[%s173] sm:$0xff]
      %v186 = vld [vmem:[%s173 + $0x8] sm:$0xff]
      %v187 = vld [vmem:[%s173 + $0x10] sm:$0xff]
      %v188 = vld [vmem:[%s173 + $0x18] sm:$0xff]
      %v189 = vld [vmem:[%s173 + $0x20] sm:$0xff]
      %v190 = vld [vmem:[%s173 + $0x28] sm:$0xff]
      %v191 = vld [vmem:[%s173 + $0x30] sm:$0xff]
      %v192 = vld [vmem:[%s173 + $0x38] sm:$0xff]
      %v193 = vld [vmem:[%s173 + $0x40] sm:$0xff]
      %v194 = vld [vmem:[%s173 + $0x48] sm:$0xff]
      %v195 = vld [vmem:[%s173 + $0x50] sm:$0xff]
      %v196 = vld [vmem:[%s173 + $0x58] sm:$0xff]
      %v197 = vld [vmem:[%s173 + $0x60] sm:$0xff]
      %v198 = vld [vmem:[%s173 + $0x68] sm:$0xff]
      %v199 = vld [vmem:[%s173 + $0x70] sm:$0xff]
      %v200 = vld [vmem:[%s173 + $0x78] sm:$0xff]
      %v201 = vld [vmem:[%s1] sm:$0xff]
      %v202 = vld [vmem:[%s1 + $0x8] sm:$0xff]
      %v203 = vld [vmem:[%s1 + $0x10] sm:$0xff]
      %v204 = vld [vmem:[%s1 + $0x18] sm:$0xff]
      %v205 = vld [vmem:[%s1 + $0x20] sm:$0xff]
      %v206 = vld [vmem:[%s1 + $0x28] sm:$0xff]
      %v207 = vld [vmem:[%s1 + $0x30] sm:$0xff]
      %v208 = vld [vmem:[%s1 + $0x38] sm:$0xff]
      %v209 = vld [vmem:[%s1 + $0x40] sm:$0xff]
      %v210 = vld [vmem:[%s1 + $0x48] sm:$0xff]
      %v211 = vld [vmem:[%s1 + $0x50] sm:$0xff]
      %v212 = vld [vmem:[%s1 + $0x58] sm:$0xff]
      %v213 = vld [vmem:[%s1 + $0x60] sm:$0xff]
      %v214 = vld [vmem:[%s1 + $0x68] sm:$0xff]
      %v215 = vld [vmem:[%s1 + $0x70] sm:$0xff]
      %v216 = vld [vmem:[%s1 + $0x78] sm:$0xff]
      %217 = vmatpush.msra.mxu0 %v216
      %218 = vmatpush.msra.mxu0 %v215
      %219 = vmatpush.msra.mxu0 %v214
      %220 = vmatpush.msra.mxu0 %v213
      %221 = vmatpush.msra.mxu0 %v212
      %222 = vmatpush.msra.mxu0 %v211
      %223 = vmatpush.msra.mxu0 %v210
      %224 = vmatpush.msra.mxu0 %v209
      %225 = vmatpush.msra.mxu0 %v208
      %226 = vmatpush.msra.mxu0 %v207
      %227 = vmatpush.msra.mxu0 %v206
      %228 = vmatpush.msra.mxu0 %v205
      %229 = vmatpush.msra.mxu0 %v204
      %230 = vmatpush.msra.mxu0 %v203
      %231 = vmatpush.msra.mxu0 %v202
      %232 = vmatpush.msra.mxu0 %v201
      %233 = vmatmul.f32.gmra.mxu0 %v185
      %v234 = vpop.f32.mrf.mxu0
      %v235 = vadd.f32 0.0, %v234
      %236 = vmatmul.f32.gmra.mxu0 %v186
      %v237 = vpop.f32.mrf.mxu0
      %v238 = vadd.f32 0.0, %v237
      %239 = vmatmul.f32.gmra.mxu0 %v187
      %v240 = vpop.f32.mrf.mxu0
      %v241 = vadd.f32 0.0, %v240
      %242 = vmatmul.f32.gmra.mxu0 %v188
      %v243 = vpop.f32.mrf.mxu0
      %v244 = vadd.f32 0.0, %v243
      %245 = vmatmul.f32.gmra.mxu0 %v189
      %v246 = vpop.f32.mrf.mxu0
      %v247 = vadd.f32 0.0, %v246
      %248 = vmatmul.f32.gmra.mxu0 %v190
      %v249 = vpop.f32.mrf.mxu0
      %v250 = vadd.f32 0.0, %v249
      %251 = vmatmul.f32.gmra.mxu0 %v191
      %v252 = vpop.f32.mrf.mxu0
      %v253 = vadd.f32 0.0, %v252
      %254 = vmatmul.f32.gmra.mxu0 %v192
      %v255 = vpop.f32.mrf.mxu0
      %v256 = vadd.f32 0.0, %v255
      %257 = vmatmul.f32.gmra.mxu0 %v193
      %v258 = vpop.f32.mrf.mxu0
      %v259 = vadd.f32 0.0, %v258
      %260 = vmatmul.f32.gmra.mxu0 %v194
      %v261 = vpop.f32.mrf.mxu0
      %v262 = vadd.f32 0.0, %v261
      %263 = vmatmul.f32.gmra.mxu0 %v195
      %v264 = vpop.f32.mrf.mxu0
      %v265 = vadd.f32 0.0, %v264
      %266 = vmatmul.f32.gmra.mxu0 %v196
      %v267 = vpop.f32.mrf.mxu0
      %v268 = vadd.f32 0.0, %v267
      %269 = vmatmul.f32.gmra.mxu0 %v197
      %v270 = vpop.f32.mrf.mxu0
      %v271 = vadd.f32 0.0, %v270
      %272 = vmatmul.f32.gmra.mxu0 %v198
      %v273 = vpop.f32.mrf.mxu0
      %v274 = vadd.f32 0.0, %v273
      %275 = vmatmul.f32.gmra.mxu0 %v199
      %v276 = vpop.f32.mrf.mxu0
      %v277 = vadd.f32 0.0, %v276
      %278 = vmatmul.f32.gmra.mxu0 %v200
      %v279 = vpop.f32.mrf.mxu0
      %v280 = vadd.f32 0.0, %v279
      %281 = vdwg.mxu0
      %282 = vst [vmem:[%s179] sm:$0xff] %v235
      %283 = vst [vmem:[%s179 + $0x8] sm:$0xff] %v238
      %284 = vst [vmem:[%s179 + $0x10] sm:$0xff] %v241
      %285 = vst [vmem:[%s179 + $0x18] sm:$0xff] %v244
      %286 = vst [vmem:[%s179 + $0x20] sm:$0xff] %v247
      %287 = vst [vmem:[%s179 + $0x28] sm:$0xff] %v250
      %288 = vst [vmem:[%s179 + $0x30] sm:$0xff] %v253
      %289 = vst [vmem:[%s179 + $0x38] sm:$0xff] %v256
      %290 = vst [vmem:[%s179 + $0x40] sm:$0xff] %v259
      %291 = vst [vmem:[%s179 + $0x48] sm:$0xff] %v262
      %292 = vst [vmem:[%s179 + $0x50] sm:$0xff] %v265
      %293 = vst [vmem:[%s179 + $0x58] sm:$0xff] %v268
      %294 = vst [vmem:[%s179 + $0x60] sm:$0xff] %v271
      %295 = vst [vmem:[%s179 + $0x68] sm:$0xff] %v274
      %296 = vst [vmem:[%s179 + $0x70] sm:$0xff] %v277
      %297 = vst [vmem:[%s179 + $0x78] sm:$0xff] %v280
      %v298 = vadd.f32 %v235, %v238
      %v299 = vadd.f32 %v298, %v241
      %v300 = vadd.f32 %v299, %v244
      %v301 = vadd.f32 %v300, %v247
      %v302 = vadd.f32 %v301, %v250
      %v303 = vadd.f32 %v302, %v253
      %v304 = vadd.f32 %v303, %v256
      %v305 = vadd.f32 %v304, %v259
      %v306 = vadd.f32 %v305, %v262
      %v307 = vadd.f32 %v306, %v265
      %v308 = vadd.f32 %v307, %v268
      %v309 = vadd.f32 %v308, %v271
      %v310 = vadd.f32 %v309, %v274
      %v311 = vadd.f32 %v310, %v277
      %v312 = vadd.f32 %v311, %v280
      %v313 = vrot.slane %v312, 4
      %v314 = vadd.f32 %v312, %v313
      %v315 = vrot.slane %v314, 2
      %v316 = vadd.f32 %v314, %v315
      %v317 = vrot.slane %v316, 1
      %v318 = vadd.f32 %v316, %v317
      %v319 = vmul.f32 %v235, %v235
      %v320 = vmul.f32 %v238, %v238
      %v321 = vmul.f32 %v241, %v241
      %v322 = vmul.f32 %v244, %v244
      %v323 = vmul.f32 %v247, %v247
      %v324 = vmul.f32 %v250, %v250
      %v325 = vmul.f32 %v253, %v253
      %v326 = vmul.f32 %v256, %v256
      %v327 = vmul.f32 %v259, %v259
      %v328 = vmul.f32 %v262, %v262
      %v329 = vmul.f32 %v265, %v265
      %v330 = vmul.f32 %v268, %v268
      %v331 = vmul.f32 %v271, %v271
      %v332 = vmul.f32 %v274, %v274
      %v333 = vmul.f32 %v277, %v277
      %v334 = vmul.f32 %v280, %v280
      %v335 = vadd.f32 %v319, %v320
      %v336 = vadd.f32 %v335, %v321
      %v337 = vadd.f32 %v336, %v322
      %v338 = vadd.f32 %v337, %v323
      %v339 = vadd.f32 %v338, %v324
      %v340 = vadd.f32 %v339, %v325
      %v341 = vadd.f32 %v340, %v326
      %v342 = vadd.f32 %v341, %v327
      %v343 = vadd.f32 %v342, %v328
      %v344 = vadd.f32 %v343, %v329
      %v345 = vadd.f32 %v344, %v330
      %v346 = vadd.f32 %v345, %v331
      %v347 = vadd.f32 %v346, %v332
      %v348 = vadd.f32 %v347, %v333
      %v349 = vadd.f32 %v348, %v334
      %v350 = vrot.slane %v349, 4
      %v351 = vadd.f32 %v349, %v350
      %v352 = vrot.slane %v351, 2
      %v353 = vadd.f32 %v351, %v352
      %v354 = vrot.slane %v353, 1
      %v355 = vadd.f32 %v353, %v354
      %vm356 = vcmask 1040384
      %v357 = vsel %vm356, %v318, %v355
      %vm358 = vcmask 1041408
      %v359 = vsel %vm358, %v357, 0.0
      %360 = vst [vmem:[%s184] sm:$0xff] %v359
      %s361 = smul.u32 16, %s15
      %p362 = scmp.lt.s32.totalorder %s361, 63
      %s363 = scalar_select %p362, %s361, 63
      %s364 = smul.addr %s363, 8
      %s365 = scalar_lea.vmem %s2, %s364
      %p366 = scmp.lt.s32.totalorder %s15, 3
      %s367 = scalar_select %p366, %s15, 3
      %s368 = smul.addr %s367, 8
      %s369 = scalar_lea.vmem %s3, %s368
      // Predicated region
      $region29: #{double_conv2d_forward.4} parent=27 // pred_check
        %p370 = pneg %p80
      $region30: #{double_conv2d_forward.4} parent=27 // pred_check_branch
        %372 = sbr.rel (%p370) target = $region32
      $region31: #{double_conv2d_forward.4} parent=27 // pred_region
        %s373 = smul.u32 16, %s15
      $region32: #{double_conv2d_forward.4} parent=27 // pred_fallthru
        _
      // Predicated region
      $region33: #{double_conv2d_forward.4} parent=27 // pred_check
        %p374 = pneg %p106
      $region34: #{double_conv2d_forward.4} parent=27 // pred_check_branch
        %376 = sbr.rel (%p374) target = $region36
      $region35: #{double_conv2d_forward.4} parent=27 // pred_region
        _
      $region36: #{double_conv2d_forward.4} parent=27 // pred_fallthru
        _
    $region28: #{double_conv2d_forward.4} parent=5 // pred_fallthru
      _
    %p377 = scmp.le.s32.totalorder 2, %s10
    // Predicated region
    $region37: #{double_conv2d_forward.4} parent=5 // pred_check
      %p378 = pneg %p377
    $region38: #{double_conv2d_forward.4} parent=5 // pred_check_branch
      %380 = sbr.rel (%p378) target = $region40
    $region39: #{double_conv2d_forward.4} parent=5 // pred_region
      %s381 = ssub.s32 %s10, 2
      // Predicated region
      $region41: #{double_conv2d_forward.4} parent=39 // pred_check
        %p382 = pneg %p86
      $region42: #{double_conv2d_forward.4} parent=39 // pred_check_branch
        %384 = sbr.rel (%p382) target = $region44
      $region43: #{double_conv2d_forward.4} parent=39 // pred_region
        %s385 = smul.u32 16, %s16
        %p386 = scmp.lt.s32.totalorder %s385, 63
        %s387 = scalar_select %p386, %s385, 63
        %s388 = smul.addr %s387, 8
        %s389 = scalar_lea.vmem %s2, %s388
      $region44: #{double_conv2d_forward.4} parent=39 // pred_fallthru
        _
      // Predicated region
      $region45: #{double_conv2d_forward.4} parent=39 // pred_check
        %p390 = pneg %p112
      $region46: #{double_conv2d_forward.4} parent=39 // pred_check_branch
        %392 = sbr.rel (%p390) target = $region48
      $region47: #{double_conv2d_forward.4} parent=39 // pred_region
        %p393 = scmp.lt.s32.totalorder %s16, 3
        %s394 = scalar_select %p393, %s16, 3
        %s395 = smul.addr %s394, 8
        %s396 = scalar_lea.vmem %s3, %s395
      $region48: #{double_conv2d_forward.4} parent=39 // pred_fallthru
        _
    $region40: #{double_conv2d_forward.4} parent=5 // pred_fallthru
      _
  $region6: #{double_conv2d_forward.4} parent=0 // loop_footer
    %s14 = sadd.s32 1, %s10
  $region7: #{double_conv2d_forward.4} parent=0 // loop_footer_branch
    %9 = sbr.rel target = $region3
  $region8: #{double_conv2d_forward.4} parent=0 // loop_exit
    _

// kernel: double_conv2d_forward.5
$region0: #{double_conv2d_forward.5}
  #allocation0 [shape = 'u32[]', space=smem, size = 0x4, offset = 0x4, fixed_abs, tag = 'smem constant byte address 0x4 - core index']
  #allocation1 [shape = 'u32[72,128]{1,0:T(1,128)}', space=vmem, size = 0x9000, scoped, tag = 'internal scratch']
  %s0 = inlined_call_operand.vmem [shape: f32[512,128], index: 0, kind: input, shape index: {}]
  %s1 = inlined_call_operand.vmem [shape: f32[8,128], index: 1, kind: input, shape index: {}]
  %s2 = inlined_call_operand.vmem [shape: f32[512,128], index: 2, kind: output, shape index: {}]
  %s3 = sld [smem:[#allocation0]]
  $region41: #{double_conv2d_forward.5} parent=0
    _
  %s5 = ssub.s32 1, %s3
  %s6 = scalar_select 0, %s5, %s3
  loop: start=0, step=1, limit=6
  $region2: #{double_conv2d_forward.5} parent=0 // loop_pre_header
    _
  $region3: #{double_conv2d_forward.5} parent=0 // loop_header
    %s8 = sphi 0, %s12
    %p9 = scmp.ge.s32.totalorder %s8, 6
    %s18 = sphi 0, %s20
    %s21 = sphi 0, %s18
    %s22 = sphi 0, %s21
    %s38 = sphi 0, %s22
    %s42 = sphi 0, %s42
    %s44 = sphi 0, %s42
    %s45 = sphi 0, %s44
    %s59 = sphi 0, %s45
    %s65 = sphi 0, %s67
    %s68 = sphi 0, %s65
    %s69 = sphi 0, %s68
    %s85 = sphi 0, %s69
  $region4: #{double_conv2d_forward.5} parent=0 // loop_header_branch
    %11 = sbr.rel (%p9) target = $region8
  $region5: #{double_conv2d_forward.5} parent=0 // loop_body
    %s13 = ssub.s32 %s8, 1
    %s14 = ssub.s32 %s8, 2
    %s15 = sadd.s32 %s8, 1
    %s16 = ssub.s32 %s8, %s15
    %p17 = scmp.eq.s32.totalorder %s16, 0
    %s19 = sadd.s32 %s18, 1
    %s20 = scalar_select %p17, %s18, %s19
    %p23 = pneg %p17
    %p24 = scmp.eq.s32.totalorder %s8, 3
    %p25 = por %p23, %p24
    %p26 = scmp.ne.s32.totalorder %s18, %s21
    %p27 = scmp.eq.s32.totalorder %s8, 0
    %p28 = por %p26, %p27
    %p29 = scmp.ne.s32.totalorder %s18, %s21
    %p30 = scmp.eq.s32.totalorder %s13, 3
    %p31 = por %p29, %p30
    %p32 = scmp.ne.s32.totalorder %s21, %s22
    %p33 = scmp.eq.s32.totalorder %s13, 0
    %p34 = por %p32, %p33
    %p35 = scmp.ne.s32.totalorder %s21, %s22
    %p36 = scmp.eq.s32.totalorder %s14, 3
    %p37 = por %p35, %p36
    %p39 = scmp.ne.s32.totalorder %s22, %s38
    %p40 = scmp.eq.s32.totalorder %s14, 0
    %p41 = por %p39, %p40
    %s43 = sadd.s32 %s42, 1
    %p46 = scmp.eq.s32.totalorder %s8, 3
    %p47 = scmp.ne.s32.totalorder %s42, %s44
    %p48 = scmp.eq.s32.totalorder %s8, 0
    %p49 = por %p47, %p48
    %p50 = scmp.ne.s32.totalorder %s42, %s44
    %p51 = scmp.eq.s32.totalorder %s13, 3
    %p52 = por %p50, %p51
    %p53 = scmp.ne.s32.totalorder %s44, %s45
    %p54 = scmp.eq.s32.totalorder %s13, 0
    %p55 = por %p53, %p54
    %p56 = scmp.ne.s32.totalorder %s44, %s45
    %p57 = scmp.eq.s32.totalorder %s14, 3
    %p58 = por %p56, %p57
    %p60 = scmp.ne.s32.totalorder %s45, %s59
    %p61 = scmp.eq.s32.totalorder %s14, 0
    %p62 = por %p60, %p61
    %s63 = ssub.s32 %s8, %s15
    %p64 = scmp.eq.s32.totalorder %s63, 0
    %s66 = sadd.s32 %s65, 1
    %s67 = scalar_select %p64, %s65, %s66
    %p70 = pneg %p64
    %p71 = scmp.eq.s32.totalorder %s8, 3
    %p72 = por %p70, %p71
    %p73 = scmp.ne.s32.totalorder %s65, %s68
    %p74 = scmp.eq.s32.totalorder %s8, 0
    %p75 = por %p73, %p74
    %p76 = scmp.ne.s32.totalorder %s65, %s68
    %p77 = scmp.eq.s32.totalorder %s13, 3
    %p78 = por %p76, %p77
    %p79 = scmp.ne.s32.totalorder %s68, %s69
    %p80 = scmp.eq.s32.totalorder %s13, 0
    %p81 = por %p79, %p80
    %p82 = scmp.ne.s32.totalorder %s68, %s69
    %p83 = scmp.eq.s32.totalorder %s14, 3
    %p84 = por %p82, %p83
    %p86 = scmp.ne.s32.totalorder %s69, %s85
    %p87 = scmp.eq.s32.totalorder %s14, 0
    %p88 = por %p86, %p87
    %p89 = scmp.le.s32.totalorder 1, %s8
    %p90 = scmp.lt.s32.totalorder %s8, 5
    %p91 = pnand %p89, %p90
    %p92 = pneg %p91
    // Predicated region
    $region9: #{double_conv2d_forward.5} parent=5 // pred_check
      _
    $region10: #{double_conv2d_forward.5} parent=5 // pred_check_branch
      %94 = sbr.rel (%p91) target = $region12
    $region11: #{double_conv2d_forward.5} parent=5 // pred_region
      %s95 = ssub.s32 %s8, 1
      // Predicated region
      $region13: #{double_conv2d_forward.5} parent=11 // pred_check
        %p96 = pneg %p55
      $region14: #{double_conv2d_forward.5} parent=11 // pred_check_branch
        %98 = sbr.rel (%p96) target = $region16
      $region15: #{double_conv2d_forward.5} parent=11 // pred_region
        _
      $region16: #{double_conv2d_forward.5} parent=11 // pred_fallthru
        _
    $region12: #{double_conv2d_forward.5} parent=5 // pred_fallthru
      _
    %p99 = scmp.lt.s32.totalorder %s8, 4
    // Predicated region
    $region17: #{double_conv2d_forward.5} parent=5 // pred_check
      %p100 = pneg %p99
    $region18: #{double_conv2d_forward.5} parent=5 // pred_check_branch
      %102 = sbr.rel (%p100) target = $region20
    $region19: #{double_conv2d_forward.5} parent=5 // pred_region
      // Predicated region
      $region21: #{double_conv2d_forward.5} parent=19 // pred_check
        %p103 = pneg %p28
      $region22: #{double_conv2d_forward.5} parent=19 // pred_check_branch
        %105 = sbr.rel (%p103) target = $region24
      $region23: #{double_conv2d_forward.5} parent=19 // pred_region
        %s106 = smul.u32 16, %s8
        %p107 = scmp.lt.s32.totalorder %s106, 63
        %s108 = scalar_select %p107, %s106, 63
        %s109 = smul.addr %s108, 8
        %s110 = scalar_lea.vmem %s0, %s109
        %s111 = smul.u32 16, %s8
      $region24: #{double_conv2d_forward.5} parent=19 // pred_fallthru
        _
    $region20: #{double_conv2d_forward.5} parent=5 // pred_fallthru
      _
    %p112 = scmp.le.s32.totalorder 1, %s8
    %p113 = scmp.lt.s32.totalorder %s8, 5
    %p114 = pnand %p112, %p113
    %p115 = pneg %p114
    // Predicated region
    $region25: #{double_conv2d_forward.5} parent=5 // pred_check
      _
    $region26: #{double_conv2d_forward.5} parent=5 // pred_check_branch
      %117 = sbr.rel (%p114) target = $region28
    $region27: #{double_conv2d_forward.5} parent=5 // pred_region
      %s118 = ssub.s32 %s8, 1
      %s119 = smul.u32 16, %s13
      %p120 = scmp.lt.s32.totalorder %s119, 63
      %s121 = scalar_select %p120, %s119, 63
      %s122 = smul.addr %s121, 8
      %s123 = scalar_lea.vmem %s0, %s122
      %p124 = pneg %p34
      %p125 = pneg %p31
      %p126 = pneg %p55
      %p127 = pneg %p52
      %p128 = pneg %p81
      %p129 = pneg %p78
      %s130 = smul.u32 16, %s13
      %p131 = scmp.lt.s32.totalorder %s130, 63
      %s132 = scalar_select %p131, %s130, 63
      %s133 = smul.addr %s132, 8
      %s134 = scalar_lea.vmem %s2, %s133
      %s135 = smul.u32 16, %s13
      %p136 = scmp.lt.s32.totalorder %s135, 63
      %s137 = scalar_select %p136, %s135, 63
      %s138 = smul.addr %s137, 8
      %s139 = scalar_lea.vmem %s0, %s138
      %s140 = smul.u32 16, %s13
      %s141 = smul.u32 16, %s13
      %p142 = scmp.lt.s32.totalorder %s141, 63
      %s143 = scalar_select %p142, %s141, 63
      %s144 = smul.addr %s143, 8
      %s145 = scalar_lea.vmem %s2, %s144
      %s146 = smul.u32 16, %s13
      %v147 = vld [vmem:[%s1] sm:$0x1]
      %v148 = vld [vmem:[%s1 + $0x1] sm:$0x1]
      %v149 = vld [vmem:[%s139] sm:$0xff]
      %v150 = vld [vmem:[%s139 + $0x8] sm:$0xff]
      %v151 = vld [vmem:[%s139 + $0x10] sm:$0xff]
      %v152 = vld [vmem:[%s139 + $0x18] sm:$0xff]
      %v153 = vld [vmem:[%s139 + $0x20] sm:$0xff]
      %v154 = vld [vmem:[%s139 + $0x28] sm:$0xff]
      %v155 = vld [vmem:[%s139 + $0x30] sm:$0xff]
      %v156 = vld [vmem:[%s139 + $0x38] sm:$0xff]
      %v157 = vld [vmem:[%s139 + $0x40] sm:$0xff]
      %v158 = vld [vmem:[%s139 + $0x48] sm:$0xff]
      %v159 = vld [vmem:[%s139 + $0x50] sm:$0xff]
      %v160 = vld [vmem:[%s139 + $0x58] sm:$0xff]
      %v161 = vld [vmem:[%s139 + $0x60] sm:$0xff]
      %v162 = vld [vmem:[%s139 + $0x68] sm:$0xff]
      %v163 = vld [vmem:[%s139 + $0x70] sm:$0xff]
      %v164 = vld [vmem:[%s139 + $0x78] sm:$0xff]
      %v165 = vperm.slane %v147, 0
      %v166 = vmul.f32 %v149, %v165
      %v167 = vmul.f32 %v150, %v165
      %v168 = vmul.f32 %v151, %v165
      %v169 = vmul.f32 %v152, %v165
      %v170 = vmul.f32 %v153, %v165
      %v171 = vmul.f32 %v154, %v165
      %v172 = vmul.f32 %v155, %v165
      %v173 = vmul.f32 %v156, %v165
      %v174 = vmul.f32 %v157, %v165
      %v175 = vmul.f32 %v158, %v165
      %v176 = vmul.f32 %v159, %v165
      %v177 = vmul.f32 %v160, %v165
      %v178 = vmul.f32 %v161, %v165
      %v179 = vmul.f32 %v162, %v165
      %v180 = vmul.f32 %v163, %v165
      %v181 = vmul.f32 %v164, %v165
      %v182 = vperm.slane %v148, 0
      %v183 = vadd.f32 %v166, %v182
      %v184 = vadd.f32 %v167, %v182
      %v185 = vadd.f32 %v168, %v182
      %v186 = vadd.f32 %v169, %v182
      %v187 = vadd.f32 %v170, %v182
      %v188 = vadd.f32 %v171, %v182
      %v189 = vadd.f32 %v172, %v182
      %v190 = vadd.f32 %v173, %v182
      %v191 = vadd.f32 %v174, %v182
      %v192 = vadd.f32 %v175, %v182
      %v193 = vadd.f32 %v176, %v182
      %v194 = vadd.f32 %v177, %v182
      %v195 = vadd.f32 %v178, %v182
      %v196 = vadd.f32 %v179, %v182
      %v197 = vadd.f32 %v180, %v182
      %v198 = vadd.f32 %v181, %v182
      %v199 = vmax.f32 %v183, 0.0
      %v200 = vmax.f32 %v184, 0.0
      %v201 = vmax.f32 %v185, 0.0
      %v202 = vmax.f32 %v186, 0.0
      %v203 = vmax.f32 %v187, 0.0
      %v204 = vmax.f32 %v188, 0.0
      %v205 = vmax.f32 %v189, 0.0
      %v206 = vmax.f32 %v190, 0.0
      %v207 = vmax.f32 %v191, 0.0
      %v208 = vmax.f32 %v192, 0.0
      %v209 = vmax.f32 %v193, 0.0
      %v210 = vmax.f32 %v194, 0.0
      %v211 = vmax.f32 %v195, 0.0
      %v212 = vmax.f32 %v196, 0.0
      %v213 = vmax.f32 %v197, 0.0
      %v214 = vmax.f32 %v198, 0.0
      %215 = vst [vmem:[%s145] sm:$0xff] %v199
      %216 = vst [vmem:[%s145 + $0x8] sm:$0xff] %v200
      %217 = vst [vmem:[%s145 + $0x10] sm:$0xff] %v201
      %218 = vst [vmem:[%s145 + $0x18] sm:$0xff] %v202
      %219 = vst [vmem:[%s145 + $0x20] sm:$0xff] %v203
      %220 = vst [vmem:[%s145 + $0x28] sm:$0xff] %v204
      %221 = vst [vmem:[%s145 + $0x30] sm:$0xff] %v205
      %222 = vst [vmem:[%s145 + $0x38] sm:$0xff] %v206
      %223 = vst [vmem:[%s145 + $0x40] sm:$0xff] %v207
      %224 = vst [vmem:[%s145 + $0x48] sm:$0xff] %v208
      %225 = vst [vmem:[%s145 + $0x50] sm:$0xff] %v209
      %226 = vst [vmem:[%s145 + $0x58] sm:$0xff] %v210
      %227 = vst [vmem:[%s145 + $0x60] sm:$0xff] %v211
      %228 = vst [vmem:[%s145 + $0x68] sm:$0xff] %v212
      %229 = vst [vmem:[%s145 + $0x70] sm:$0xff] %v213
      %230 = vst [vmem:[%s145 + $0x78] sm:$0xff] %v214
      %s231 = smul.u32 16, %s13
      %p232 = scmp.lt.s32.totalorder %s231, 63
      %s233 = scalar_select %p232, %s231, 63
      %s234 = smul.addr %s233, 8
      %s235 = scalar_lea.vmem %s2, %s234
      // Predicated region
      $region29: #{double_conv2d_forward.5} parent=27 // pred_check
        %p236 = pneg %p78
      $region30: #{double_conv2d_forward.5} parent=27 // pred_check_branch
        %238 = sbr.rel (%p236) target = $region32
      $region31: #{double_conv2d_forward.5} parent=27 // pred_region
        %s239 = smul.u32 16, %s13
      $region32: #{double_conv2d_forward.5} parent=27 // pred_fallthru
        _
    $region28: #{double_conv2d_forward.5} parent=5 // pred_fallthru
      _
    %p240 = scmp.le.s32.totalorder 2, %s8
    // Predicated region
    $region33: #{double_conv2d_forward.5} parent=5 // pred_check
      %p241 = pneg %p240
    $region34: #{double_conv2d_forward.5} parent=5 // pred_check_branch
      %243 = sbr.rel (%p241) target = $region36
    $region35: #{double_conv2d_forward.5} parent=5 // pred_region
      %s244 = ssub.s32 %s8, 2
      // Predicated region
      $region37: #{double_conv2d_forward.5} parent=35 // pred_check
        %p245 = pneg %p84
      $region38: #{double_conv2d_forward.5} parent=35 // pred_check_branch
        %247 = sbr.rel (%p245) target = $region40
      $region39: #{double_conv2d_forward.5} parent=35 // pred_region
        %s248 = smul.u32 16, %s14
        %p249 = scmp.lt.s32.totalorder %s248, 63
        %s250 = scalar_select %p249, %s248, 63
        %s251 = smul.addr %s250, 8
        %s252 = scalar_lea.vmem %s2, %s251
      $region40: #{double_conv2d_forward.5} parent=35 // pred_fallthru
        _
    $region36: #{double_conv2d_forward.5} parent=5 // pred_fallthru
      _
  $region6: #{double_conv2d_forward.5} parent=0 // loop_footer
    %s12 = sadd.s32 1, %s8
  $region7: #{double_conv2d_forward.5} parent=0 // loop_footer_branch
    %7 = sbr.rel target = $region3
  $region8: #{double_conv2d_forward.5} parent=0 // loop_exit
    _

</llo_original>
